<compile_context>
chip_gen: v5e
topology: v5e:2x2
jax: 0.10.0
libtpu: 0.0.40
codegen_flags: <defaults>
</compile_context>

<pallas_src>
import jax
import jax.numpy as jnp
from jax import lax
from jax.experimental import pallas as pl
from jax.experimental.pallas import tpu as pltpu

_EPS = float(jnp.finfo(jnp.float32).eps)
_LANES = 128
_ACC_SUBLANES = 8            # per-core accumulator height (one f32 vreg tall)
_NUM_CORE_SHARDS = 2         # leading "parallel" grid axis (2 TCs on v7x)
_BLOCK_BYTE_BUDGET = 4 << 20  # 4 MiB / input block -> 2 in x 2 buf = 16 MiB VMEM


def _cdiv(a: int, b: int) -> int:
    return -(-a // b)


def _round_up(x: int, m: int) -> int:
    return ((x + m - 1) // m) * m


def _sublane_packing(dtype) -> int:
    # Native packed sublane height: 8 rows for 4-byte, 16 for 2-byte, 32 for 1-byte.
    return max(_ACC_SUBLANES, 32 // jnp.dtype(dtype).itemsize)


def _make_mse_sum_kernel(tile_rows: int, rows_valid: int, blocks_per_core: int,
                         num_full_blocks: int, needs_mask: bool):
    """sum((yt - yp)^2) over a (rows_valid, 128) slab, one (8,128) partial per core."""

    def kernel(yp_ref, yt_ref, o_ref):
        i = pl.program_id(1)  # streaming ("arbitrary") axis within this core

        @pl.when(i == 0)
        def _init():
            o_ref[...] = jnp.zeros_like(o_ref)

        # Upcast in-kernel so bf16/f16/int8 inputs only move their native HBM bytes.
        d = yt_ref[...].astype(jnp.float32) - yp_ref[...].astype(jnp.float32)
        sq = d * d

        def _fold(x):
            # Fold rows into the (8,128) accumulator: pure elementwise VPU adds;
            # the single cross-lane reduce is deferred to the JAX wrapper.
            return jnp.sum(
                x.reshape(tile_rows // _ACC_SUBLANES, _ACC_SUBLANES, _LANES), axis=0
            )

        if needs_mask:
            g = pl.program_id(0) * blocks_per_core + i  # global block id

            @pl.when(g < num_full_blocks)
            def _full():  # fully-valid blocks: no mask cost
                o_ref[0] += _fold(sq)

            @pl.when(g >= num_full_blocks)
            def _ragged():  # trailing partial / padded blocks only
                row_ids = (
                    lax.broadcasted_iota(jnp.int32, (tile_rows, _LANES), 0)
                    + g * tile_rows
                )
                o_ref[0] += _fold(jnp.where(row_ids < rows_valid, sq, 0.0))
        else:
            o_ref[0] += _fold(sq)

    return kernel


def mse_pallas(y_pred: jax.Array, y_true: jax.Array, *,
               block_byte_budget: int = _BLOCK_BYTE_BUDGET) -> jax.Array:
    assert y_pred.shape == y_true.shape
    batch = y_true.shape[0]  # len(y_true) in the PyTorch module

    n = int(y_pred.size)
    itemsize = jnp.dtype(y_pred.dtype).itemsize
    packing = _sublane_packing(y_pred.dtype)

    # Flatten in native dtype (metadata-only for contiguous inputs; no pad copy).
    yp_flat = jnp.ravel(y_pred)
    yt_flat = jnp.ravel(y_true)

    rows_full = n // _LANES          # number of complete 128-lane rows
    n_prefix = rows_full * _LANES

    if rows_full < 2 * packing:
        # Too small to be worth a kernel launch (also guarantees tile <= rows below).
        d = yt_flat.astype(jnp.float32) - yp_flat.astype(jnp.float32)
        return jnp.sum(d * d) / (batch + _EPS)

    # Lane tail (< 128 leftover elements): plain JAX, negligible.
    tail = n - n_prefix
    if tail > 0:
        dt = (yt_flat[n_prefix:].astype(jnp.float32)
              - yp_flat[n_prefix:].astype(jnp.float32))
        tail_sum = jnp.sum(dt * dt)
    else:
        tail_sum = jnp.float32(0.0)

    # Dtype-aware tile: rows from a byte budget, rounded to native sublane packing.
    budget_rows = max(packing, (block_byte_budget // (_LANES * itemsize)) // packing * packing)
    per_core_rows = _round_up(_cdiv(rows_full, _NUM_CORE_SHARDS), packing)
    tile_rows = min(budget_rows, per_core_rows)

    num_blocks = _cdiv(rows_full, tile_rows)                    # blocks covering real data
    blocks_per_core = _cdiv(num_blocks, _NUM_CORE_SHARDS)
    num_blocks_padded = blocks_per_core * _NUM_CORE_SHARDS
    num_full_blocks = rows_full // tile_rows                    # blocks with no ragged rows
    needs_mask = (num_blocks_padded * tile_rows) != rows_full

    yp2 = yp_flat[:n_prefix].reshape(rows_full, _LANES)
    yt2 = yt_flat[:n_prefix].reshape(rows_full, _LANES)

    def in_map(c, i):
        g = c * blocks_per_core + i
        if num_blocks_padded != num_blocks:
            # Padded (fully-masked) blocks: clamp to a valid block so the DMA is in-bounds.
            g = jnp.minimum(g, num_blocks - 1)
        return (g, 0)

    block_bytes = tile_rows * _LANES * itemsize
    # 2 inputs x 2 pipeline buffers + per-core output/accumulator + slack.
    vmem_limit = max(4 << 20, 2 * 2 * block_bytes + (2 << 20))

    kernel = _make_mse_sum_kernel(tile_rows, rows_full, blocks_per_core,
                                  num_full_blocks, needs_mask)

    partials = pl.pallas_call(
        kernel,
        out_shape=jax.ShapeDtypeStruct((_NUM_CORE_SHARDS, _ACC_SUBLANES, _LANES),
                                       jnp.float32),
        grid_spec=pltpu.PrefetchScalarGridSpec(
            num_scalar_prefetch=0,
            grid=(_NUM_CORE_SHARDS, blocks_per_core),
            in_specs=[
                pl.BlockSpec((tile_rows, _LANES), in_map),
                pl.BlockSpec((tile_rows, _LANES), in_map),
            ],
            # Per-core lane-dense output block; resident across the inner axis.
            out_specs=pl.BlockSpec((1, _ACC_SUBLANES, _LANES), lambda c, i: (c, 0, 0)),
        ),
        compiler_params=pltpu.CompilerParams(
            dimension_semantics=("parallel", "arbitrary"),
            vmem_limit_bytes=int(vmem_limit),
        ),
        cost_estimate=pl.CostEstimate(
            flops=3 * n_prefix,
            transcendentals=0,
            bytes_accessed=2 * n_prefix * itemsize
            + _NUM_CORE_SHARDS * _ACC_SUBLANES * _LANES * 4,
        ),
    )(yp2, yt2)

    prefix_sum = jnp.sum(partials)           # tiny (2,8,128) reduce in plain JAX
    squared_sum = prefix_sum + tail_sum
    # Scalar divide in the wrapper (Python-scalar denom -> nothing traced captured).
    return squared_sum / (batch + _EPS)


def _mse_ref(y_pred, y_true):
    d = y_true.astype(jnp.float32) - y_pred.astype(jnp.float32)
    return jnp.sum(d * d) / (y_true.shape[0] + _EPS)


if __name__ == "__main__":
    key = jax.random.PRNGKey(0)
    k1, k2, k3, k4, k5, k6, k7, k8 = jax.random.split(key, 8)

    # 1) Base case (module-style NCHW input), f32.
    shape = (2, 4, 16, 16)
    yp = jax.random.normal(k1, shape, dtype=jnp.float32)
    yt = jax.random.normal(k2, shape, dtype=jnp.float32)
    out = mse_pallas(yp, yt)
    jax.block_until_ready(out)
    assert jnp.allclose(out, _mse_ref(yp, yt), rtol=1e-5, atol=1e-5)

    # 2) Ragged shapes: partial last row-block + <128-element lane tail.
    shape2 = (3, 5, 17, 13)
    yp2 = jax.random.normal(k3, shape2, dtype=jnp.float32)
    yt2 = jax.random.normal(k4, shape2, dtype=jnp.float32)
    out2 = mse_pallas(yp2, yt2)
    jax.block_until_ready(out2)
    assert jnp.allclose(out2, _mse_ref(yp2, yt2), rtol=1e-5, atol=1e-5)

    # 3) bf16 inputs: dtype-aware tiling, in-kernel upcast.
    shape3 = (2, 8, 32, 32)
    yp3 = jax.random.normal(k5, shape3, dtype=jnp.bfloat16)
    yt3 = jax.random.normal(k6, shape3, dtype=jnp.bfloat16)
    out3 = mse_pallas(yp3, yt3)
    jax.block_until_ready(out3)
    assert jnp.allclose(out3, _mse_ref(yp3, yt3), rtol=1e-4, atol=1e-4)

    # 4) Tiny block budget: forces many blocks, odd block count (clamped padded
    #    block on core 1) and ragged trailing block.
    shape4 = (1, 17 * 128 + 5)
    yp4 = jax.random.normal(k7, shape4, dtype=jnp.float32)
    yt4 = jax.random.normal(k8, shape4, dtype=jnp.float32)
    out4 = mse_pallas(yp4, yt4, block_byte_budget=8 * _LANES * 4)
    jax.block_until_ready(out4)
    assert jnp.allclose(out4, _mse_ref(yp4, yt4), rtol=1e-5, atol=1e-5)

    print("KERNEL_OK")
</pallas_src>

<mosaic_0001>
module attributes {stable_mosaic.version = 11 : i64} {
  func.func @kernel(%arg0: i32, %arg1: i32, %arg2: memref<8x128xf32, #tpu.memory_space<vmem>>, %arg3: memref<8x128xf32, #tpu.memory_space<vmem>>, %arg4: memref<1x8x128xf32, #tpu.memory_space<vmem>>) attributes {dimension_semantics = [#tpu.dimension_semantics<parallel>, #tpu.dimension_semantics<arbitrary>], iteration_bounds = array<i64: 2, 1>, scalar_prefetch = 0 : i64, scratch_operands = 0 : i64, tpu.core_type = #tpu.core_type<tc>, window_params = [{transform_indices = @transform_0, window_bounds = array<i64: 8, 128>}, {transform_indices = @transform_1, window_bounds = array<i64: 8, 128>}, {transform_indices = @transform_2, window_bounds = array<i64: 1, 8, 128>}]} {
    %c0_i32 = arith.constant 0 : i32
    %0 = arith.cmpi eq, %arg1, %c0_i32 : i32
    %1 = arith.extui %0 : i1 to i32
    %c0_i32_0 = arith.constant 0 : i32
    %2 = arith.cmpi ne, %1, %c0_i32_0 : i32
    scf.if %2 {
      %cst_10 = arith.constant 0.000000e+00 : f32
      %15 = vector.broadcast %cst_10 : f32 to vector<1x8x128xf32>
      %c0_11 = arith.constant 0 : index
      %c0_12 = arith.constant 0 : index
      %c0_13 = arith.constant 0 : index
      %16 = vector.load %arg4[%c0_11, %c0_12, %c0_13] : memref<1x8x128xf32, #tpu.memory_space<vmem>>, vector<1x8x128xf32>
      tpu.vector_store %arg4[%c0_11, %c0_12, %c0_13], %15 {strides = array<i32>} : memref<1x8x128xf32, #tpu.memory_space<vmem>>, vector<1x8x128xf32>,
    } else {
    }
    %c0 = arith.constant 0 : index
    %c0_1 = arith.constant 0 : index
    %3 = vector.load %arg3[%c0, %c0_1] : memref<8x128xf32, #tpu.memory_space<vmem>>, vector<8x128xf32>
    %c0_2 = arith.constant 0 : index
    %c0_3 = arith.constant 0 : index
    %4 = vector.load %arg2[%c0_2, %c0_3] : memref<8x128xf32, #tpu.memory_space<vmem>>, vector<8x128xf32>
    %5 = arith.subf %3, %4 : vector<8x128xf32>
    %6 = arith.mulf %5, %5 : vector<8x128xf32>
    %c0_4 = arith.constant 0 : index
    %c0_5 = arith.constant 0 : index
    %c0_6 = arith.constant 0 : index
    %7 = vector.load %arg4[%c0_4, %c0_5, %c0_6] : memref<1x8x128xf32, #tpu.memory_space<vmem>>, vector<1x8x128xf32>
    %8 = vector.shape_cast %7 : vector<1x8x128xf32> to vector<8x128xf32>
    %9 = vector.shape_cast %6 : vector<8x128xf32> to vector<1x8x128xf32>
    %cst = arith.constant dense<0.000000e+00> : vector<8x128xf32>
    %10 = vector.multi_reduction <add>, %9, %cst [0] : vector<1x8x128xf32> to vector<8x128xf32>
    %11 = arith.addf %8, %10 : vector<8x128xf32>
    %c0_7 = arith.constant 0 : index
    %c0_8 = arith.constant 0 : index
    %c0_9 = arith.constant 0 : index
    %12 = vector.load %arg4[%c0_7, %c0_8, %c0_9] : memref<1x8x128xf32, #tpu.memory_space<vmem>>, vector<1x8x128xf32>
    %13 = vector.shape_cast %12 : vector<1x8x128xf32> to vector<8x128xf32>
    %14 = vector.shape_cast %11 : vector<8x128xf32> to vector<1x8x128xf32>
    tpu.vector_store %arg4[%c0_7, %c0_8, %c0_9], %14 {strides = array<i32>} : memref<1x8x128xf32, #tpu.memory_space<vmem>>, vector<1x8x128xf32>,
    return
  }
  func.func @transform_0(%arg0: i32, %arg1: i32) -> (i32, i32) {
    %c1_i32 = arith.constant 1 : i32
    %0 = arith.muli %arg0, %c1_i32 : i32
    %1 = arith.addi %0, %arg1 : i32
    %c0_i32 = arith.constant 0 : i32
    %c0_i32_0 = arith.constant 0 : i32
    return %1, %c0_i32 : i32, i32
  }
  func.func @transform_1(%arg0: i32, %arg1: i32) -> (i32, i32) {
    %c1_i32 = arith.constant 1 : i32
    %0 = arith.muli %arg0, %c1_i32 : i32
    %1 = arith.addi %0, %arg1 : i32
    %c0_i32 = arith.constant 0 : i32
    %c0_i32_0 = arith.constant 0 : i32
    return %1, %c0_i32 : i32, i32
  }
  func.func @transform_2(%arg0: i32, %arg1: i32) -> (i32, i32, i32) {
    %c0_i32 = arith.constant 0 : i32
    %c0_i32_0 = arith.constant 0 : i32
    %c0_i32_1 = arith.constant 0 : i32
    return %arg0, %c0_i32, %c0_i32_0 : i32, i32, i32
  }
}

</mosaic_0001>

<llo_original>
// kernel: tpu_custom_call.1
$region0: #{tpu_custom_call.1}
  #allocation0 [shape = 'u32[]', space=smem, size = 0x4, offset = 0x4, fixed_abs, tag = 'smem constant byte address 0x4 - core index']
  #allocation1 [shape = 'u32[72,128]{1,0:T(1,128)}', space=vmem, size = 0x9000, scoped, tag = 'internal scratch']
  %s0 = inlined_call_operand.hbm [shape: f32[16,128], index: 0, kind: input, shape index: {}]
  %s1 = inlined_call_operand.hbm [shape: f32[16,128], index: 1, kind: input, shape index: {}]
  %s2 = inlined_call_operand.hbm [shape: f32[2,8,128], index: 2, kind: output, shape index: {}]
  %s3 = sld [smem:[#allocation0]]
  $region53: #{tpu_custom_call.1} parent=0
    _
  %s5 = ssub.s32 1, %s3
  %s6 = scalar_select 0, %s5, %s3
  $region1: #{tpu_custom_call.1} parent=0
    #allocation2 [shape = 'u8[8192]{0}', space=vmem, size = 0x2000, scoped, tag = 'input window, operand 0']
    #allocation3 [shape = 's32[2]{0}', space=sflag, size = 0x8, scoped, tag = 'scoped memory for tpu_custom_call.1']
    #allocation4 [shape = 's32[2]{0}', space=sflag, size = 0x8, scoped, tag = 'scoped memory for tpu_custom_call.1']
    #allocation5 [shape = 'u8[8192]{0}', space=vmem, size = 0x2000, scoped, tag = 'input window, operand 1']
    #allocation6 [shape = 's32[2]{0}', space=sflag, size = 0x8, scoped, tag = 'scoped memory for tpu_custom_call.1']
    #allocation7 [shape = 'u8[8192]{0}', space=vmem, size = 0x2000, scoped, tag = 'output window, operand 0']
    %7 = vsyncpa [#allocation3], 0
    %s8 = scalar_lea.sflag [#allocation3], 1
    %9 = vsyncpa %s8, 0
    %10 = vsyncpa [#allocation6], 0
    %s11 = scalar_lea.sflag [#allocation6], 1
    %12 = vsyncpa %s11, 0
    %13 = vsyncpa [#allocation4], 0
    %s14 = scalar_lea.sflag [#allocation4], 1
    %15 = vsyncpa %s14, 0
    loop: start=0, step=1, limit=4
    $region2: #{tpu_custom_call.1} parent=1 // loop_pre_header
      _
    $region3: #{tpu_custom_call.1} parent=1 // loop_header
      %s17 = sphi 0, %s21
      %p18 = scmp.ge.s32.totalorder %s17, 4
      %s24 = sphi 0, %s36
      %s25 = sphi 0, %s32
      %s26 = sphi 0, %s24
      %s27 = sphi 0, %s25
      %s28 = sphi 0, %s26
      %s29 = sphi 0, %s27
      %s41 = sphi 0, %s43
      %s44 = sphi 0, %s41
      %s45 = sphi 0, %s44
      %s61 = sphi 0, %s45
      %s69 = sphi 0, %s71
      %s72 = sphi 0, %s69
      %s73 = sphi 0, %s72
      %s89 = sphi 0, %s73
      %s95 = sphi 0, %s97
      %s98 = sphi 0, %s95
      %s99 = sphi 0, %s98
      %s115 = sphi 0, %s99
    $region4: #{tpu_custom_call.1} parent=1 // loop_header_branch
      %20 = sbr.rel (%p18) target = $region8
    $region5: #{tpu_custom_call.1} parent=1 // loop_body
      %s22 = ssub.s32 %s17, 1
      %s23 = ssub.s32 %s17, 2
      %s30 = sadd.s32 1, %s25
      %p31 = scmp.ge.s32.totalorder %s30, 1
      %s32 = scalar_select %p31, 0, %s30
      %s33 = sadd.s32 1, %s24
      %s34 = scalar_select %p31, %s33, %s24
      %p35 = scmp.ge.s32.totalorder %s34, 2
      %s36 = scalar_select %p35, 0, %s34
      %s37 = sadd.s32 %s24, %s25
      %s38 = sadd.s32 %s36, %s32
      %s39 = ssub.s32 %s37, %s38
      %p40 = scmp.eq.s32.totalorder %s39, 0
      %s42 = sadd.s32 %s41, 1
      %s43 = scalar_select %p40, %s41, %s42
      %p46 = pneg %p40
      %p47 = scmp.eq.s32.totalorder %s17, 1
      %p48 = por %p46, %p47
      %p49 = scmp.ne.s32.totalorder %s41, %s44
      %p50 = scmp.eq.s32.totalorder %s17, 0
      %p51 = por %p49, %p50
      %p52 = scmp.ne.s32.totalorder %s41, %s44
      %p53 = scmp.eq.s32.totalorder %s22, 1
      %p54 = por %p52, %p53
      %p55 = scmp.ne.s32.totalorder %s44, %s45
      %p56 = scmp.eq.s32.totalorder %s22, 0
      %p57 = por %p55, %p56
      %p58 = scmp.ne.s32.totalorder %s44, %s45
      %p59 = scmp.eq.s32.totalorder %s23, 1
      %p60 = por %p58, %p59
      %p62 = scmp.ne.s32.totalorder %s45, %s61
      %p63 = scmp.eq.s32.totalorder %s23, 0
      %p64 = por %p62, %p63
      %s65 = sadd.s32 %s24, %s25
      %s66 = sadd.s32 %s36, %s32
      %s67 = ssub.s32 %s65, %s66
      %p68 = scmp.eq.s32.totalorder %s67, 0
      %s70 = sadd.s32 %s69, 1
      %s71 = scalar_select %p68, %s69, %s70
      %p74 = pneg %p68
      %p75 = scmp.eq.s32.totalorder %s17, 1
      %p76 = por %p74, %p75
      %p77 = scmp.ne.s32.totalorder %s69, %s72
      %p78 = scmp.eq.s32.totalorder %s17, 0
      %p79 = por %p77, %p78
      %p80 = scmp.ne.s32.totalorder %s69, %s72
      %p81 = scmp.eq.s32.totalorder %s22, 1
      %p82 = por %p80, %p81
      %p83 = scmp.ne.s32.totalorder %s72, %s73
      %p84 = scmp.eq.s32.totalorder %s22, 0
      %p85 = por %p83, %p84
      %p86 = scmp.ne.s32.totalorder %s72, %s73
      %p87 = scmp.eq.s32.totalorder %s23, 1
      %p88 = por %p86, %p87
      %p90 = scmp.ne.s32.totalorder %s73, %s89
      %p91 = scmp.eq.s32.totalorder %s23, 0
      %p92 = por %p90, %p91
      %s93 = ssub.s32 %s24, %s36
      %p94 = scmp.eq.s32.totalorder %s93, 0
      %s96 = sadd.s32 %s95, 1
      %s97 = scalar_select %p94, %s95, %s96
      %p100 = pneg %p94
      %p101 = scmp.eq.s32.totalorder %s17, 1
      %p102 = por %p100, %p101
      %p103 = scmp.ne.s32.totalorder %s95, %s98
      %p104 = scmp.eq.s32.totalorder %s17, 0
      %p105 = por %p103, %p104
      %p106 = scmp.ne.s32.totalorder %s95, %s98
      %p107 = scmp.eq.s32.totalorder %s22, 1
      %p108 = por %p106, %p107
      %p109 = scmp.ne.s32.totalorder %s98, %s99
      %p110 = scmp.eq.s32.totalorder %s22, 0
      %p111 = por %p109, %p110
      %p112 = scmp.ne.s32.totalorder %s98, %s99
      %p113 = scmp.eq.s32.totalorder %s23, 1
      %p114 = por %p112, %p113
      %p116 = scmp.ne.s32.totalorder %s99, %s115
      %p117 = scmp.eq.s32.totalorder %s23, 0
      %p118 = por %p116, %p117
      %p119 = scmp.le.s32.totalorder 1, %s17
      %p120 = scmp.lt.s32.totalorder %s17, 3
      %p121 = pnand %p119, %p120
      %p122 = pneg %p121
      // Predicated region
      $region9: #{tpu_custom_call.1} parent=5 // pred_check
        _
      $region10: #{tpu_custom_call.1} parent=5 // pred_check_branch
        %124 = sbr.rel (%p121) target = $region12
      $region11: #{tpu_custom_call.1} parent=5 // pred_region
        %s125 = ssub.s32 %s17, 1
      $region12: #{tpu_custom_call.1} parent=5 // pred_fallthru
        _
      %p126 = scmp.lt.s32.totalorder %s17, 2
      // Predicated region
      $region13: #{tpu_custom_call.1} parent=5 // pred_check
        %p127 = pneg %p126
      $region14: #{tpu_custom_call.1} parent=5 // pred_check_branch
        %129 = sbr.rel (%p127) target = $region16
      $region15: #{tpu_custom_call.1} parent=5 // pred_region
        // Predicated region
        $region17: #{tpu_custom_call.1} parent=15 // pred_check
          %p130 = pneg %p51
        $region18: #{tpu_custom_call.1} parent=15 // pred_check_branch
          %132 = sbr.rel (%p130) target = $region20
        $region19: #{tpu_custom_call.1} parent=15 // pred_region
          %s133 = sand.u32 %s41, 1
          %s134 = scalar_lea.sflag [#allocation3], %s133
          %s135 = sand.u32 %s41, 1
          %s136 = smul.addr %s135, 8
          %s137 = scalar_lea.vmem [#allocation2], %s136
          %s138 = sadd.s32 %s24, %s25
          %140 = vsyncadd %s134, 0
          %s141 = smul.addr %s138, 8
          %s142 = scalar_lea.hbm %s0, %s141
          %s144 = sshll.u32 %s142, 4
          %s145 = int_to_ptr.hbm [resolvable:$true] %s144
          %s146 = sshll.u32 %s137, 4
          %s147 = int_to_ptr.vmem [resolvable:$true] %s146
          %149 = dma.hbm_to_vmem [thread:$0]  %s145, 128, %s147, %s134
        $region20: #{tpu_custom_call.1} parent=15 // pred_fallthru
          _
        // Predicated region
        $region21: #{tpu_custom_call.1} parent=15 // pred_check
          %p150 = pneg %p79
        $region22: #{tpu_custom_call.1} parent=15 // pred_check_branch
          %152 = sbr.rel (%p150) target = $region24
        $region23: #{tpu_custom_call.1} parent=15 // pred_region
          %s153 = sand.u32 %s69, 1
          %s154 = scalar_lea.sflag [#allocation6], %s153
          %s155 = sand.u32 %s69, 1
          %s156 = smul.addr %s155, 8
          %s157 = scalar_lea.vmem [#allocation5], %s156
          %s158 = sadd.s32 %s24, %s25
          %160 = vsyncadd %s154, 0
          %s161 = smul.addr %s158, 8
          %s162 = scalar_lea.hbm %s1, %s161
          %s164 = sshll.u32 %s162, 4
          %s165 = int_to_ptr.hbm [resolvable:$true] %s164
          %s166 = sshll.u32 %s157, 4
          %s167 = int_to_ptr.vmem [resolvable:$true] %s166
          %169 = dma.hbm_to_vmem [thread:$0]  %s165, 128, %s167, %s154
        $region24: #{tpu_custom_call.1} parent=15 // pred_fallthru
          _
      $region16: #{tpu_custom_call.1} parent=5 // pred_fallthru
        _
      %p170 = scmp.le.s32.totalorder 1, %s17
      %p171 = scmp.lt.s32.totalorder %s17, 3
      %p172 = pnand %p170, %p171
      %p173 = pneg %p172
      // Predicated region
      $region25: #{tpu_custom_call.1} parent=5 // pred_check
        _
      $region26: #{tpu_custom_call.1} parent=5 // pred_check_branch
        %175 = sbr.rel (%p172) target = $region28
      $region27: #{tpu_custom_call.1} parent=5 // pred_region
        %s176 = ssub.s32 %s17, 1
        %s177 = sand.u32 %s44, 1
        %s178 = scalar_lea.sflag [#allocation3], %s177
        %s179 = sand.u32 %s44, 1
        %s180 = smul.addr %s179, 8
        %s181 = scalar_lea.vmem [#allocation2], %s180
        // Predicated region
        $region29: #{tpu_custom_call.1} parent=27 // pred_check
          %p182 = pneg %p57
        $region30: #{tpu_custom_call.1} parent=27 // pred_check_branch
          %184 = sbr.rel (%p182) target = $region32
        $region31: #{tpu_custom_call.1} parent=27 // pred_region
          %186 = dma.done %s178, 128
        $region32: #{tpu_custom_call.1} parent=27 // pred_fallthru
          _
        %s187 = sand.u32 %s72, 1
        %s188 = scalar_lea.sflag [#allocation6], %s187
        %s189 = sand.u32 %s72, 1
        %s190 = smul.addr %s189, 8
        %s191 = scalar_lea.vmem [#allocation5], %s190
        // Predicated region
        $region33: #{tpu_custom_call.1} parent=27 // pred_check
          %p192 = pneg %p85
        $region34: #{tpu_custom_call.1} parent=27 // pred_check_branch
          %194 = sbr.rel (%p192) target = $region36
        $region35: #{tpu_custom_call.1} parent=27 // pred_region
          %196 = dma.done %s188, 128
        $region36: #{tpu_custom_call.1} parent=27 // pred_fallthru
          _
        %s197 = sand.u32 %s44, 1
        %s198 = scalar_lea.sflag [#allocation3], %s197
        %s199 = sand.u32 %s44, 1
        %s200 = smul.addr %s199, 8
        %s201 = scalar_lea.vmem [#allocation2], %s200
        %p202 = pneg %p57
        %p203 = pneg %p54
        %s204 = sand.u32 %s72, 1
        %s205 = scalar_lea.sflag [#allocation6], %s204
        %s206 = sand.u32 %s72, 1
        %s207 = smul.addr %s206, 8
        %s208 = scalar_lea.vmem [#allocation5], %s207
        %p209 = pneg %p85
        %p210 = pneg %p82
        %p211 = pneg %p111
        %p212 = pneg %p108
        %s213 = sand.u32 %s98, 1
        %s214 = scalar_lea.sflag [#allocation4], %s213
        %s215 = sand.u32 %s98, 1
        %s216 = smul.addr %s215, 8
        %s217 = scalar_lea.vmem [#allocation7], %s216
        %s218 = sadd.s32 %s26, %s27
        %s219 = sadd.s32 %s26, %s27
        %p220 = scmp.eq.s32.totalorder %s27, 0
        // Predicated region
        $region37: #{tpu_custom_call.1} parent=27 // pred_check
          %p221 = pneg %p220
        $region38: #{tpu_custom_call.1} parent=27 // pred_check_branch
          %223 = sbr.rel (%p221) target = $region40
        $region39: #{tpu_custom_call.1} parent=27 // pred_region
          %224 = vst [vmem:[%s217] sm:$0xff] 0.0
        $region40: #{tpu_custom_call.1} parent=27 // pred_fallthru
          _
        %v225 = vld [vmem:[%s191] sm:$0xff]
        %v226 = vld [vmem:[%s181] sm:$0xff]
        %v227 = vsub.f32 %v225, %v226
        %v228 = vmul.f32 %v227, %v227
        %v229 = vld [vmem:[%s217] sm:$0xff]
        %v230 = vadd.f32 %v228, 0.0
        %v231 = vadd.f32 %v229, %v230
        %232 = vst [vmem:[%s217] sm:$0xff] %v231
        %s233 = sand.u32 %s98, 1
        %s234 = scalar_lea.sflag [#allocation4], %s233
        %s235 = sand.u32 %s98, 1
        %s236 = smul.addr %s235, 8
        %s237 = scalar_lea.vmem [#allocation7], %s236
        // Predicated region
        $region41: #{tpu_custom_call.1} parent=27 // pred_check
          %p238 = pneg %p108
        $region42: #{tpu_custom_call.1} parent=27 // pred_check_branch
          %240 = sbr.rel (%p238) target = $region44
        $region43: #{tpu_custom_call.1} parent=27 // pred_region
          %242 = vsyncadd %s234, 0
          %s243 = smul.addr %s26, 8
          %s244 = scalar_lea.hbm %s2, %s243
          %s246 = sshll.u32 %s237, 4
          %s247 = int_to_ptr.vmem [resolvable:$true] %s246
          %s248 = sshll.u32 %s244, 4
          %s249 = int_to_ptr.hbm [resolvable:$true] %s248
          %251 = dma.vmem_to_hbm [thread:$0]  %s247, 128, %s249, %s234
        $region44: #{tpu_custom_call.1} parent=27 // pred_fallthru
          _
      $region28: #{tpu_custom_call.1} parent=5 // pred_fallthru
        _
      %p252 = scmp.le.s32.totalorder 2, %s17
      // Predicated region
      $region45: #{tpu_custom_call.1} parent=5 // pred_check
        %p253 = pneg %p252
      $region46: #{tpu_custom_call.1} parent=5 // pred_check_branch
        %255 = sbr.rel (%p253) target = $region48
      $region47: #{tpu_custom_call.1} parent=5 // pred_region
        %s256 = ssub.s32 %s17, 2
        // Predicated region
        $region49: #{tpu_custom_call.1} parent=47 // pred_check
          %p257 = pneg %p114
        $region50: #{tpu_custom_call.1} parent=47 // pred_check_branch
          %259 = sbr.rel (%p257) target = $region52
        $region51: #{tpu_custom_call.1} parent=47 // pred_region
          %s260 = sand.u32 %s99, 1
          %s261 = scalar_lea.sflag [#allocation4], %s260
          %s262 = sand.u32 %s99, 1
          %s263 = smul.addr %s262, 8
          %s264 = scalar_lea.vmem [#allocation7], %s263
          %266 = dma.done %s261, 128
        $region52: #{tpu_custom_call.1} parent=47 // pred_fallthru
          _
      $region48: #{tpu_custom_call.1} parent=5 // pred_fallthru
        _
    $region6: #{tpu_custom_call.1} parent=1 // loop_footer
      %s21 = sadd.s32 1, %s17
    $region7: #{tpu_custom_call.1} parent=1 // loop_footer_branch
      %16 = sbr.rel target = $region3
    $region8: #{tpu_custom_call.1} parent=1 // loop_exit
      _
    %267 = vsyncpa [#allocation3], 1
    %s268 = scalar_lea.sflag [#allocation3], 1
    %269 = vsyncpa %s268, 1
    %270 = vsyncpa [#allocation6], 1
    %s271 = scalar_lea.sflag [#allocation6], 1
    %272 = vsyncpa %s271, 1
    %273 = vsyncpa [#allocation4], 1
    %s274 = scalar_lea.sflag [#allocation4], 1
    %275 = vsyncpa %s274, 1

</llo_original>
